<compile_context>
chip_gen: v7x
topology: tpu7x:2x2x1
jax: 0.10.0
libtpu: 0.0.40
codegen_flags: <defaults>
</compile_context>

<pallas_src>
import functools

import jax
import jax.numpy as jnp
from jax.experimental import pallas as pl
from jax.experimental.pallas import tpu as pltpu

LANE = 128  # vreg lane width


def _round_up(x, m):
    return (x + m - 1) // m * m


def _cdiv(a, b):
    return -(-a // b)


def agent_policy_kernel(
    state_ref,            # (TILE_B, S_in)   f32
    w1_ref, b1_ref,       # (S_in, H_pad) bf16, (1, H_pad) f32
    w2_ref, b2_ref,       # (H_pad, H_pad) bf16, (1, H_pad) f32
    wh_ref, bh_ref,       # fused head: (H_pad, N_pad) bf16, (1, N_pad) f32
    out_ref,              # (TILE_B, N_pad) f32:
                          #   cols [0:A) = log-probs, col A = value, col A+1 = lse
    *,
    action_dim,
):
    # shared_network: Linear -> ReLU -> Linear -> ReLU
    # bf16 MXU inputs, f32 accumulation / bias / ReLU.
    x = state_ref[...].astype(jnp.bfloat16)
    h1 = jnp.dot(x, w1_ref[...], preferred_element_type=jnp.float32) + b1_ref[...]
    h1 = jnp.maximum(h1, 0.0)
    h2 = jnp.dot(h1.astype(jnp.bfloat16), w2_ref[...],
                 preferred_element_type=jnp.float32) + b2_ref[...]
    h2 = jnp.maximum(h2, 0.0)

    # Fused actor+critic head: one lane-dense MXU pass.
    # cols [0:A) = logits, col A = value, cols >= A+1 = 0 (zero-padded weights).
    y = jnp.dot(h2.astype(jnp.bfloat16), wh_ref[...],
                preferred_element_type=jnp.float32) + bh_ref[...]

    # Categorical(logits=...) normalization over the first `action_dim` lanes
    # only (value column + padded lanes must not enter logsumexp).
    lane = jax.lax.broadcasted_iota(jnp.int32, y.shape, dimension=1)
    is_logit = lane < action_dim
    masked = jnp.where(is_logit, y, -jnp.inf)
    m = jnp.max(masked, axis=-1, keepdims=True)
    p = jnp.exp(masked - m)                      # masked lanes: exp(-inf) = 0
    lse = m + jnp.log(jnp.sum(p, axis=-1, keepdims=True))

    # Assemble the single output slab.
    out = jnp.where(is_logit, y - lse, y)        # log-probs | value | zeros
    out = jnp.where(lane == action_dim + 1, lse, out)
    out_ref[...] = out


def pack_params(params, state_dim, action_dim, hidden_dim):
    """Pad feature dims, fuse actor+critic heads, cast weights to bf16."""
    s_in = _round_up(state_dim, 8)              # sublane granularity only
    h_pad = _round_up(hidden_dim, LANE)
    n_pad = _round_up(action_dim + 2, LANE)     # A logits + value + lse
    bf16, f32 = jnp.bfloat16, jnp.float32

    w1 = jnp.zeros((s_in, h_pad), bf16).at[:state_dim, :hidden_dim].set(
        params["w1"].astype(bf16))
    b1 = jnp.zeros((1, h_pad), f32).at[:, :hidden_dim].set(params["b1"])
    w2 = jnp.zeros((h_pad, h_pad), bf16).at[:hidden_dim, :hidden_dim].set(
        params["w2"].astype(bf16))
    b2 = jnp.zeros((1, h_pad), f32).at[:, :hidden_dim].set(params["b2"])

    wh = jnp.zeros((h_pad, n_pad), bf16)
    wh = wh.at[:hidden_dim, :action_dim].set(params["wa"].astype(bf16))
    wh = wh.at[:hidden_dim, action_dim:action_dim + 1].set(params["wc"].astype(bf16))
    bh = jnp.zeros((1, n_pad), f32)
    bh = bh.at[:, :action_dim].set(params["ba"])
    bh = bh.at[:, action_dim:action_dim + 1].set(params["bc"])

    return {"w1": w1, "b1": b1, "w2": w2, "b2": b2, "wh": wh, "bh": bh}


@functools.partial(jax.jit, static_argnames=("action_dim", "tile_b"))
def agent_policy_forward(state, packed, action_dim, tile_b=1024):
    B, S = state.shape
    s_in = packed["w1"].shape[0]
    h_pad = packed["w2"].shape[0]
    n_pad = packed["wh"].shape[1]

    # Batch tiling:
    #  * >= 2 grid steps when B > 8 so "parallel" shards across v7x's 2 TCs,
    #  * tile rows are a multiple of 8 sublanes, capped at `tile_b`,
    #  * batch padding is always < one tile (no ~2x waste for ragged batches).
    n_tiles = 1 if B <= 8 else max(2, _cdiv(B, tile_b))
    tb = _round_up(_cdiv(B, n_tiles), 8)
    n_tiles = _cdiv(B, tb)
    b_pad = n_tiles * tb

    x = state.astype(jnp.float32)
    if (b_pad, s_in) != (B, S):
        # Minimal pad: batch to a tile multiple, features to a multiple of 8.
        x = jnp.zeros((b_pad, s_in), jnp.float32).at[:B, :S].set(x)

    resident = lambda i: (0, 0)   # weights/biases stay VMEM-resident across grid
    batched = lambda i: (i, 0)

    kernel = functools.partial(agent_policy_kernel, action_dim=action_dim)
    out = pl.pallas_call(
        kernel,
        out_shape=jax.ShapeDtypeStruct((b_pad, n_pad), jnp.float32),
        grid=(n_tiles,),
        in_specs=[
            pl.BlockSpec((tb, s_in), batched),
            pl.BlockSpec((s_in, h_pad), resident),
            pl.BlockSpec((1, h_pad), resident),
            pl.BlockSpec((h_pad, h_pad), resident),
            pl.BlockSpec((1, h_pad), resident),
            pl.BlockSpec((h_pad, n_pad), resident),
            pl.BlockSpec((1, n_pad), resident),
        ],
        out_specs=pl.BlockSpec((tb, n_pad), batched),
        compiler_params=pltpu.CompilerParams(
            dimension_semantics=("parallel",),  # shards batch tiles on v7x's 2 TCs
        ),
    )(x, packed["w1"], packed["b1"], packed["w2"], packed["b2"],
      packed["wh"], packed["bh"])

    log_probs = out[:B, :action_dim]
    value = out[:B, action_dim:action_dim + 1]
    lse = out[:B, action_dim + 1:action_dim + 2]
    logits = log_probs + lse          # exact reconstruction of the actor head
    return logits, log_probs, value


def init_params(key, state_dim, action_dim, hidden_dim):
    """nn.Linear-style init: U(-1/sqrt(fan_in), 1/sqrt(fan_in)); weights (in,out)."""
    def linear(k, fan_in, fan_out):
        kw, kb = jax.random.split(k)
        bound = 1.0 / jnp.sqrt(float(fan_in))
        w = jax.random.uniform(kw, (fan_in, fan_out), jnp.float32, -bound, bound)
        b = jax.random.uniform(kb, (1, fan_out), jnp.float32, -bound, bound)
        return w, b

    k1, k2, k3, k4 = jax.random.split(key, 4)
    w1, b1 = linear(k1, state_dim, hidden_dim)
    w2, b2 = linear(k2, hidden_dim, hidden_dim)
    wa, ba = linear(k3, hidden_dim, action_dim)
    wc, bc = linear(k4, hidden_dim, 1)
    return {"w1": w1, "b1": b1, "w2": w2, "b2": b2,
            "wa": wa, "ba": ba, "wc": wc, "bc": bc}


if __name__ == "__main__":
    # Small shapes consistent with the module's forward signature.
    batch, state_dim, action_dim, hidden_dim = 2, 16, 8, 32

    key = jax.random.PRNGKey(0)
    k_params, k_state = jax.random.split(key)
    params = init_params(k_params, state_dim, action_dim, hidden_dim)
    packed = pack_params(params, state_dim, action_dim, hidden_dim)
    state = jax.random.normal(k_state, (batch, state_dim), jnp.float32)

    logits, log_probs, value = agent_policy_forward(state, packed, action_dim)
    jax.block_until_ready((logits, log_probs, value))

    # Pure-JAX f32 reference against the unpadded, unfused parameters.
    # Kernel uses bf16 MXU inputs (f32 accumulation), so tolerance is loosened.
    h1 = jnp.maximum(state @ params["w1"] + params["b1"], 0.0)
    h2 = jnp.maximum(h1 @ params["w2"] + params["b2"], 0.0)
    ref_logits = h2 @ params["wa"] + params["ba"]
    ref_logp = ref_logits - jax.scipy.special.logsumexp(
        ref_logits, axis=-1, keepdims=True)
    ref_value = h2 @ params["wc"] + params["bc"]

    assert logits.shape == (batch, action_dim)
    assert log_probs.shape == (batch, action_dim)
    assert value.shape == (batch, 1)
    assert jnp.allclose(logits, ref_logits, atol=3e-2), "logits mismatch"
    assert jnp.allclose(log_probs, ref_logp, atol=3e-2), "log-prob mismatch"
    assert jnp.allclose(value, ref_value, atol=3e-2), "value mismatch"

    # TODO(synk): Categorical.sample() (stochastic action draw) is left to the
    # host-side wrapper (jax.random.categorical on the returned logits); for
    # single-env acting (B<=8) it could be fused in-kernel with pltpu.prng_* +
    # Gumbel-max to avoid the second dispatch.
    print("KERNEL_OK")
</pallas_src>

<mosaic_0001>
module attributes {stable_mosaic.version = 11 : i64} {
  func.func @agent_policy_kernel(%arg0: i32, %arg1: memref<8x16xf32, #tpu.memory_space<vmem>>, %arg2: memref<16x128xbf16, #tpu.memory_space<vmem>>, %arg3: memref<1x128xf32, #tpu.memory_space<vmem>>, %arg4: memref<128x128xbf16, #tpu.memory_space<vmem>>, %arg5: memref<1x128xf32, #tpu.memory_space<vmem>>, %arg6: memref<128x128xbf16, #tpu.memory_space<vmem>>, %arg7: memref<1x128xf32, #tpu.memory_space<vmem>>, %arg8: memref<8x128xf32, #tpu.memory_space<vmem>>) attributes {dimension_semantics = [#tpu.dimension_semantics<parallel>], iteration_bounds = array<i64: 1>, scalar_prefetch = 0 : i64, scratch_operands = 0 : i64, tpu.core_type = #tpu.core_type<tc>, window_params = [{transform_indices = @transform_0, window_bounds = array<i64: 8, 16>}, {pipeline_mode = #tpu.pipeline_mode<synchronous>, transform_indices = @transform_1, window_bounds = array<i64: 16, 128>}, {pipeline_mode = #tpu.pipeline_mode<synchronous>, transform_indices = @transform_2, window_bounds = array<i64: 1, 128>}, {pipeline_mode = #tpu.pipeline_mode<synchronous>, transform_indices = @transform_3, window_bounds = array<i64: 128, 128>}, {pipeline_mode = #tpu.pipeline_mode<synchronous>, transform_indices = @transform_4, window_bounds = array<i64: 1, 128>}, {pipeline_mode = #tpu.pipeline_mode<synchronous>, transform_indices = @transform_5, window_bounds = array<i64: 128, 128>}, {pipeline_mode = #tpu.pipeline_mode<synchronous>, transform_indices = @transform_6, window_bounds = array<i64: 1, 128>}, {transform_indices = @transform_7, window_bounds = array<i64: 8, 128>}]} {
    %c0 = arith.constant 0 : index
    %c0_0 = arith.constant 0 : index
    %0 = vector.load %arg1[%c0, %c0_0] : memref<8x16xf32, #tpu.memory_space<vmem>>, vector<8x16xf32>
    %1 = arith.truncf %0 : vector<8x16xf32> to vector<8x16xbf16>
    %c0_1 = arith.constant 0 : index
    %c0_2 = arith.constant 0 : index
    %2 = vector.load %arg2[%c0_1, %c0_2] : memref<16x128xbf16, #tpu.memory_space<vmem>>, vector<16x128xbf16>
    %cst = arith.constant dense<0.000000e+00> : vector<8x128xf32>
    %3 = tpu.matmul %1, %2, %cst {dimension_numbers = #tpu.dot_dimension_numbers<[1], [0], [0], [1], [0, 0, 1, 1], [], []>} : vector<8x16xbf16>, vector<16x128xbf16>, vector<8x128xf32> -> vector<8x128xf32>
    %c0_3 = arith.constant 0 : index
    %c0_4 = arith.constant 0 : index
    %4 = vector.load %arg3[%c0_3, %c0_4] : memref<1x128xf32, #tpu.memory_space<vmem>>, vector<1x128xf32>
    %5 = vector.broadcast %4 : vector<1x128xf32> to vector<8x128xf32>
    %6 = arith.addf %3, %5 : vector<8x128xf32>
    %cst_5 = arith.constant 0.000000e+00 : f32
    %7 = vector.broadcast %cst_5 : f32 to vector<8x128xf32>
    %8 = arith.maximumf %6, %7 : vector<8x128xf32>
    %9 = arith.truncf %8 : vector<8x128xf32> to vector<8x128xbf16>
    %c0_6 = arith.constant 0 : index
    %c0_7 = arith.constant 0 : index
    %10 = vector.load %arg4[%c0_6, %c0_7] : memref<128x128xbf16, #tpu.memory_space<vmem>>, vector<128x128xbf16>
    %cst_8 = arith.constant dense<0.000000e+00> : vector<8x128xf32>
    %11 = tpu.matmul %9, %10, %cst_8 {dimension_numbers = #tpu.dot_dimension_numbers<[1], [0], [0], [1], [0, 0, 1, 1], [], []>} : vector<8x128xbf16>, vector<128x128xbf16>, vector<8x128xf32> -> vector<8x128xf32>
    %c0_9 = arith.constant 0 : index
    %c0_10 = arith.constant 0 : index
    %12 = vector.load %arg5[%c0_9, %c0_10] : memref<1x128xf32, #tpu.memory_space<vmem>>, vector<1x128xf32>
    %13 = vector.broadcast %12 : vector<1x128xf32> to vector<8x128xf32>
    %14 = arith.addf %11, %13 : vector<8x128xf32>
    %cst_11 = arith.constant 0.000000e+00 : f32
    %15 = vector.broadcast %cst_11 : f32 to vector<8x128xf32>
    %16 = arith.maximumf %14, %15 : vector<8x128xf32>
    %17 = arith.truncf %16 : vector<8x128xf32> to vector<8x128xbf16>
    %c0_12 = arith.constant 0 : index
    %c0_13 = arith.constant 0 : index
    %18 = vector.load %arg6[%c0_12, %c0_13] : memref<128x128xbf16, #tpu.memory_space<vmem>>, vector<128x128xbf16>
    %cst_14 = arith.constant dense<0.000000e+00> : vector<8x128xf32>
    %19 = tpu.matmul %17, %18, %cst_14 {dimension_numbers = #tpu.dot_dimension_numbers<[1], [0], [0], [1], [0, 0, 1, 1], [], []>} : vector<8x128xbf16>, vector<128x128xbf16>, vector<8x128xf32> -> vector<8x128xf32>
    %c0_15 = arith.constant 0 : index
    %c0_16 = arith.constant 0 : index
    %20 = vector.load %arg7[%c0_15, %c0_16] : memref<1x128xf32, #tpu.memory_space<vmem>>, vector<1x128xf32>
    %21 = vector.broadcast %20 : vector<1x128xf32> to vector<8x128xf32>
    %22 = arith.addf %19, %21 : vector<8x128xf32>
    %23 = tpu.iota {dimensions = array<i32: 1>} : vector<8x128xi32>
    %c8_i32 = arith.constant 8 : i32
    %24 = vector.broadcast %c8_i32 : i32 to vector<8x128xi32>
    %25 = arith.cmpi slt, %23, %24 : vector<8x128xi32>
    %cst_17 = arith.constant 0xFF800000 : f32
    %26 = vector.broadcast %cst_17 : f32 to vector<8x128xf32>
    %27 = arith.select %25, %22, %26 : vector<8x128xi1>, vector<8x128xf32>
    %cst_18 = arith.constant dense<0xFF800000> : vector<8xf32>
    %28 = vector.multi_reduction <maximumf>, %27, %cst_18 [1] : vector<8x128xf32> to vector<8xf32>
    %29 = vector.shape_cast %28 : vector<8xf32> to vector<8x1xf32>
    %30 = vector.broadcast %29 : vector<8x1xf32> to vector<8x128xf32>
    %31 = arith.subf %27, %30 : vector<8x128xf32>
    %32 = math.exp %31 : vector<8x128xf32>
    %cst_19 = arith.constant dense<0.000000e+00> : vector<8xf32>
    %33 = vector.multi_reduction <add>, %32, %cst_19 [1] : vector<8x128xf32> to vector<8xf32>
    %34 = vector.shape_cast %33 : vector<8xf32> to vector<8x1xf32>
    %35 = math.log %34 : vector<8x1xf32>
    %36 = arith.addf %29, %35 : vector<8x1xf32>
    %37 = vector.broadcast %36 : vector<8x1xf32> to vector<8x128xf32>
    %38 = arith.subf %22, %37 : vector<8x128xf32>
    %39 = arith.select %25, %38, %22 : vector<8x128xi1>, vector<8x128xf32>
    %c9_i32 = arith.constant 9 : i32
    %40 = vector.broadcast %c9_i32 : i32 to vector<8x128xi32>
    %41 = arith.cmpi eq, %23, %40 : vector<8x128xi32>
    %42 = vector.shape_cast %36 : vector<8x1xf32> to vector<8x1xf32>
    %43 = vector.broadcast %42 : vector<8x1xf32> to vector<8x128xf32>
    %44 = arith.select %41, %43, %39 : vector<8x128xi1>, vector<8x128xf32>
    %c0_20 = arith.constant 0 : index
    %c0_21 = arith.constant 0 : index
    %45 = vector.load %arg8[%c0_20, %c0_21] : memref<8x128xf32, #tpu.memory_space<vmem>>, vector<8x128xf32>
    tpu.vector_store %arg8[%c0_20, %c0_21], %44 {strides = array<i32>} : memref<8x128xf32, #tpu.memory_space<vmem>>, vector<8x128xf32>,
    return
  }
  func.func @transform_0(%arg0: i32) -> (i32, i32) {
    %c0_i32 = arith.constant 0 : i32
    %c0_i32_0 = arith.constant 0 : i32
    return %arg0, %c0_i32 : i32, i32
  }
  func.func @transform_1(%arg0: i32) -> (i32, i32) {
    %c0_i32 = arith.constant 0 : i32
    %c0_i32_0 = arith.constant 0 : i32
    %c0_i32_1 = arith.constant 0 : i32
    return %c0_i32, %c0_i32_0 : i32, i32
  }
  func.func @transform_2(%arg0: i32) -> (i32, i32) {
    %c0_i32 = arith.constant 0 : i32
    %c0_i32_0 = arith.constant 0 : i32
    %c0_i32_1 = arith.constant 0 : i32
    return %c0_i32, %c0_i32_0 : i32, i32
  }
  func.func @transform_3(%arg0: i32) -> (i32, i32) {
    %c0_i32 = arith.constant 0 : i32
    %c0_i32_0 = arith.constant 0 : i32
    %c0_i32_1 = arith.constant 0 : i32
    return %c0_i32, %c0_i32_0 : i32, i32
  }
  func.func @transform_4(%arg0: i32) -> (i32, i32) {
    %c0_i32 = arith.constant 0 : i32
    %c0_i32_0 = arith.constant 0 : i32
    %c0_i32_1 = arith.constant 0 : i32
    return %c0_i32, %c0_i32_0 : i32, i32
  }
  func.func @transform_5(%arg0: i32) -> (i32, i32) {
    %c0_i32 = arith.constant 0 : i32
    %c0_i32_0 = arith.constant 0 : i32
    %c0_i32_1 = arith.constant 0 : i32
    return %c0_i32, %c0_i32_0 : i32, i32
  }
  func.func @transform_6(%arg0: i32) -> (i32, i32) {
    %c0_i32 = arith.constant 0 : i32
    %c0_i32_0 = arith.constant 0 : i32
    %c0_i32_1 = arith.constant 0 : i32
    return %c0_i32, %c0_i32_0 : i32, i32
  }
  func.func @transform_7(%arg0: i32) -> (i32, i32) {
    %c0_i32 = arith.constant 0 : i32
    %c0_i32_0 = arith.constant 0 : i32
    return %arg0, %c0_i32 : i32, i32
  }
}

</mosaic_0001>

<llo_original>
// kernel: agent_policy_forward.1
$region0: #{agent_policy_forward.1}
  #allocation0 [shape = 'u32[]', space=smem, size = 0x4, offset = 0x4, fixed_abs, tag = 'smem constant byte address 0x4 - core index']
  #allocation1 [shape = 'u32[144,128]{1,0:T(1,128)}', space=vmem, size = 0x12000, scoped, tag = 'internal scratch']
  %s0 = inlined_call_operand.vmem [shape: f32[8,16], index: 0, kind: input, shape index: {}]
  %s1 = inlined_call_operand.vmem [shape: bf16[16,128], index: 1, kind: input, shape index: {}]
  %s2 = inlined_call_operand.vmem [shape: f32[1,128], index: 2, kind: input, shape index: {}]
  %s3 = inlined_call_operand.hbm [shape: bf16[128,128], index: 3, kind: input, shape index: {}]
  %s4 = inlined_call_operand.vmem [shape: f32[1,128], index: 4, kind: input, shape index: {}]
  %s5 = inlined_call_operand.hbm [shape: bf16[128,128], index: 5, kind: input, shape index: {}]
  %s6 = inlined_call_operand.vmem [shape: f32[1,128], index: 6, kind: input, shape index: {}]
  %s7 = inlined_call_operand.vmem [shape: f32[8,128], index: 7, kind: output, shape index: {}]
  %s8 = sld [smem:[#allocation0]]
  $region46: #{agent_policy_forward.1} parent=0
    _
  %s10 = ssub.s32 1, %s8
  %s11 = scalar_select 0, %s10, %s8
  $region1: #{agent_policy_forward.1} parent=0
    #allocation2 [shape = 'u8[32768]{0}', space=vmem, size = 0x8000, scoped, tag = 'input window, operand 3, single buffered']
    #allocation3 [shape = 's32[1]{0}', space=sflag, size = 0x4, scoped, tag = 'scoped memory for agent_policy_forward.1']
    #allocation4 [shape = 'u8[32768]{0}', space=vmem, size = 0x8000, scoped, tag = 'input window, operand 5, single buffered']
    #allocation5 [shape = 's32[1]{0}', space=sflag, size = 0x4, scoped, tag = 'scoped memory for agent_policy_forward.1']
    %12 = vsyncpa [#allocation3], 0
    %13 = vsyncpa [#allocation5], 0
    // Predicated region
    $region2: #{agent_policy_forward.1} parent=1 // pred_check
      _
    $region3: #{agent_policy_forward.1} parent=1 // pred_check_branch
      %15 = sbr.rel (0) target = $region5
    $region4: #{agent_policy_forward.1} parent=1 // pred_region
      _
    $region5: #{agent_policy_forward.1} parent=1 // pred_fallthru
      _
    // Predicated region
    $region6: #{agent_policy_forward.1} parent=1 // pred_check
      _
    $region7: #{agent_policy_forward.1} parent=1 // pred_check_branch
      %17 = sbr.rel (0) target = $region9
    $region8: #{agent_policy_forward.1} parent=1 // pred_region
      _
    $region9: #{agent_policy_forward.1} parent=1 // pred_fallthru
      _
    // Predicated region
    $region10: #{agent_policy_forward.1} parent=1 // pred_check
      _
    $region11: #{agent_policy_forward.1} parent=1 // pred_check_branch
      %19 = sbr.rel (0) target = $region13
    $region12: #{agent_policy_forward.1} parent=1 // pred_region
      _
    $region13: #{agent_policy_forward.1} parent=1 // pred_fallthru
      _
    // Predicated region
    $region14: #{agent_policy_forward.1} parent=1 // pred_check
      _
    $region15: #{agent_policy_forward.1} parent=1 // pred_check_branch
      %21 = sbr.rel (0) target = $region17
    $region16: #{agent_policy_forward.1} parent=1 // pred_region
      %s23 = ssub.s32 1024, 1024
      %24 = vsyncadd [#allocation3], %s23
      %s25 = sshll.u32 [#allocation2], 4
      %s26 = int_to_ptr.vmem [resolvable:$true] %s25
      %31 = dma.hbm_to_vmem [thread:$0]  %s3, 1024, %s26, [#allocation3], 64, 64, 4
    $region17: #{agent_policy_forward.1} parent=1 // pred_fallthru
      _
    // Predicated region
    $region18: #{agent_policy_forward.1} parent=1 // pred_check
      _
    $region19: #{agent_policy_forward.1} parent=1 // pred_check_branch
      %33 = sbr.rel (0) target = $region21
    $region20: #{agent_policy_forward.1} parent=1 // pred_region
      _
    $region21: #{agent_policy_forward.1} parent=1 // pred_fallthru
      _
    // Predicated region
    $region22: #{agent_policy_forward.1} parent=1 // pred_check
      _
    $region23: #{agent_policy_forward.1} parent=1 // pred_check_branch
      %35 = sbr.rel (0) target = $region25
    $region24: #{agent_policy_forward.1} parent=1 // pred_region
      %s37 = ssub.s32 1024, 1024
      %38 = vsyncadd [#allocation5], %s37
      %s39 = sshll.u32 [#allocation4], 4
      %s40 = int_to_ptr.vmem [resolvable:$true] %s39
      %45 = dma.hbm_to_vmem [thread:$0]  %s5, 1024, %s40, [#allocation5], 64, 64, 4
    $region25: #{agent_policy_forward.1} parent=1 // pred_fallthru
      _
    // Predicated region
    $region26: #{agent_policy_forward.1} parent=1 // pred_check
      _
    $region27: #{agent_policy_forward.1} parent=1 // pred_check_branch
      %47 = sbr.rel (0) target = $region29
    $region28: #{agent_policy_forward.1} parent=1 // pred_region
      _
    $region29: #{agent_policy_forward.1} parent=1 // pred_fallthru
      _
    // Predicated region
    $region30: #{agent_policy_forward.1} parent=1 // pred_check
      _
    $region31: #{agent_policy_forward.1} parent=1 // pred_check_branch
      %49 = sbr.rel (0) target = $region33
    $region32: #{agent_policy_forward.1} parent=1 // pred_region
      %50 = dma.done [#allocation3], 1024
    $region33: #{agent_policy_forward.1} parent=1 // pred_fallthru
      _
    // Predicated region
    $region34: #{agent_policy_forward.1} parent=1 // pred_check
      _
    $region35: #{agent_policy_forward.1} parent=1 // pred_check_branch
      %52 = sbr.rel (0) target = $region37
    $region36: #{agent_policy_forward.1} parent=1 // pred_region
      %53 = dma.done [#allocation5], 1024
    $region37: #{agent_policy_forward.1} parent=1 // pred_fallthru
      _
    %v55 = vld [vmem:[%s0] sm:$0xff]
    %v56 = vpack.c.bf16 %v55, %v55
    %v57 = vld [vmem:[%s1] sm:$0xf]
    %v58 = vld [vmem:[%s1 + $0x4] sm:$0xf]
    %v59 = vld [vmem:[%s2] sm:$0x1]
    %v61 = vlaneseq
    %v62 = vshrl.u32 %v61, 7
    %v63 = vsub.s32 0, %v62
    %v64 = vrot.slane %v59, %v63
    %v68 = vunpack.c.l.b16 %v57
    %v69 = vunpack.c.l.b16 %v58
    %v70 = vpack.c.b16 %v69, %v68
    %vm72 = vcmask 130048
    %v74 = vsel %vm72, %v56, 0
    %76 = vmatprep.subr.bf16.mxu0 0
    %77 = vmatpush1.bf16.msra.mxu0 %v70
    %78 = vmatprep.subr.bf16.mxu0 0
    %79 = vmatpush1.bf16.msra.mxu0 0
    %80 = vmatprep.subr.bf16.mxu0 0
    %81 = vmatpush1.bf16.msra.mxu0 0
    %82 = vmatprep.subr.bf16.mxu0 0
    %83 = vmatpush1.bf16.msra.mxu0 0
    %84 = vmatprep.subr.bf16.mxu0 0
    %85 = vmatpush1.bf16.msra.mxu0 0
    %86 = vmatprep.subr.bf16.mxu0 0
    %87 = vmatpush1.bf16.msra.mxu0 0
    %88 = vmatprep.subr.bf16.mxu0 0
    %89 = vmatpush1.bf16.msra.mxu0 0
    %90 = vmatprep.subr.bf16.mxu0 0
    %91 = vmatpush1.bf16.msra.mxu0 0
    %92 = vmatprep.subr.bf16.mxu0 0
    %93 = vmatpush1.bf16.msra.mxu0 0
    %94 = vmatprep.subr.bf16.mxu0 0
    %95 = vmatpush1.bf16.msra.mxu0 0
    %96 = vmatprep.subr.bf16.mxu0 0
    %97 = vmatpush1.bf16.msra.mxu0 0
    %98 = vmatprep.subr.bf16.mxu0 0
    %99 = vmatpush1.bf16.msra.mxu0 0
    %100 = vmatprep.subr.bf16.mxu0 0
    %101 = vmatpush1.bf16.msra.mxu0 0
    %102 = vmatprep.subr.bf16.mxu0 0
    %103 = vmatpush1.bf16.msra.mxu0 0
    %104 = vmatprep.subr.bf16.mxu0 0
    %105 = vmatpush1.bf16.msra.mxu0 0
    %106 = vmatprep.subr.bf16.mxu0 0
    %107 = vmatpush1.bf16.msra.mxu0 0
    %108 = vmatprep.mubr.bf16.mxu0 0
    %109 = vmatmul.mubr.bf16.gmra.mrb[0].mxu0 %v74
    %v110 = vpop.f32.mrb[0].mxu0
    %v111 = vadd.f32 %v64, %v110
    %v112 = vpop.f32.mrb[0].mxu0
    %v113 = vpop.f32.mrb[0].mxu0
    %v114 = vpop.f32.mrb[0].mxu0
    %115 = vdwg.mxu0
    %v116 = vmax.f32 %v111, 0.0
    %v117 = vpack.c.bf16 %v116, %v116
    %v118 = vld [vmem:[#allocation2] sm:$0xf]
    %v119 = vld [vmem:[#allocation2 + $0x4] sm:$0xf]
    %v120 = vld [vmem:[#allocation2 + $0x8] sm:$0xf]
    %v121 = vld [vmem:[#allocation2 + $0xc] sm:$0xf]
    %v122 = vld [vmem:[#allocation2 + $0x10] sm:$0xf]
    %v123 = vld [vmem:[#allocation2 + $0x14] sm:$0xf]
    %v124 = vld [vmem:[#allocation2 + $0x18] sm:$0xf]
    %v125 = vld [vmem:[#allocation2 + $0x1c] sm:$0xf]
    %v126 = vld [vmem:[#allocation2 + $0x20] sm:$0xf]
    %v127 = vld [vmem:[#allocation2 + $0x24] sm:$0xf]
    %v128 = vld [vmem:[#allocation2 + $0x28] sm:$0xf]
    %v129 = vld [vmem:[#allocation2 + $0x2c] sm:$0xf]
    %v130 = vld [vmem:[#allocation2 + $0x30] sm:$0xf]
    %v131 = vld [vmem:[#allocation2 + $0x34] sm:$0xf]
    %v132 = vld [vmem:[#allocation2 + $0x38] sm:$0xf]
    %v133 = vld [vmem:[#allocation2 + $0x3c] sm:$0xf]
    %v134 = vld [vmem:[%s4] sm:$0x1]
    %v136 = vlaneseq
    %v137 = vshrl.u32 %v136, 7
    %v138 = vsub.s32 0, %v137
    %v139 = vrot.slane %v134, %v138
    %v157 = vunpack.c.l.b16 %v118
    %v158 = vunpack.c.l.b16 %v119
    %v159 = vunpack.c.l.b16 %v120
    %v160 = vunpack.c.l.b16 %v121
    %v161 = vunpack.c.l.b16 %v122
    %v162 = vunpack.c.l.b16 %v123
    %v163 = vunpack.c.l.b16 %v124
    %v164 = vunpack.c.l.b16 %v125
    %v165 = vunpack.c.l.b16 %v126
    %v166 = vunpack.c.l.b16 %v127
    %v167 = vunpack.c.l.b16 %v128
    %v168 = vunpack.c.l.b16 %v129
    %v169 = vunpack.c.l.b16 %v130
    %v170 = vunpack.c.l.b16 %v131
    %v171 = vunpack.c.l.b16 %v132
    %v172 = vunpack.c.l.b16 %v133
    %v173 = vpack.c.b16 %v158, %v157
    %v174 = vpack.c.b16 %v160, %v159
    %v175 = vpack.c.b16 %v162, %v161
    %v176 = vpack.c.b16 %v164, %v163
    %v177 = vpack.c.b16 %v166, %v165
    %v178 = vpack.c.b16 %v168, %v167
    %v179 = vpack.c.b16 %v170, %v169
    %v180 = vpack.c.b16 %v172, %v171
    %189 = vmatprep.subr.bf16.mxu0 0
    %190 = vmatpush1.bf16.msra.mxu0 %v173
    %191 = vmatprep.subr.bf16.mxu0 0
    %192 = vmatpush1.bf16.msra.mxu0 %v174
    %193 = vmatprep.subr.bf16.mxu0 0
    %194 = vmatpush1.bf16.msra.mxu0 %v175
    %195 = vmatprep.subr.bf16.mxu0 0
    %196 = vmatpush1.bf16.msra.mxu0 %v176
    %197 = vmatprep.subr.bf16.mxu0 0
    %198 = vmatpush1.bf16.msra.mxu0 %v177
    %199 = vmatprep.subr.bf16.mxu0 0
    %200 = vmatpush1.bf16.msra.mxu0 %v178
    %201 = vmatprep.subr.bf16.mxu0 0
    %202 = vmatpush1.bf16.msra.mxu0 %v179
    %203 = vmatprep.subr.bf16.mxu0 0
    %204 = vmatpush1.bf16.msra.mxu0 %v180
    %205 = vmatprep.subr.bf16.mxu0 0
    %206 = vmatpush1.bf16.msra.mxu0 0
    %207 = vmatprep.subr.bf16.mxu0 0
    %208 = vmatpush1.bf16.msra.mxu0 0
    %209 = vmatprep.subr.bf16.mxu0 0
    %210 = vmatpush1.bf16.msra.mxu0 0
    %211 = vmatprep.subr.bf16.mxu0 0
    %212 = vmatpush1.bf16.msra.mxu0 0
    %213 = vmatprep.subr.bf16.mxu0 0
    %214 = vmatpush1.bf16.msra.mxu0 0
    %215 = vmatprep.subr.bf16.mxu0 0
    %216 = vmatpush1.bf16.msra.mxu0 0
    %217 = vmatprep.subr.bf16.mxu0 0
    %218 = vmatpush1.bf16.msra.mxu0 0
    %219 = vmatprep.subr.bf16.mxu0 0
    %220 = vmatpush1.bf16.msra.mxu0 0
    %221 = vmatprep.mubr.bf16.mxu0 0
    %222 = vmatmul.mubr.bf16.gmra.mrb[0].mxu0 %v117
    %v223 = vpop.f32.mrb[0].mxu0
    %v224 = vadd.f32 %v139, %v223
    %v225 = vpop.f32.mrb[0].mxu0
    %v226 = vpop.f32.mrb[0].mxu0
    %v227 = vpop.f32.mrb[0].mxu0
    %228 = vdwg.mxu0
    %v229 = vmax.f32 %v224, 0.0
    %v230 = vpack.c.bf16 %v229, %v229
    %v231 = vld [vmem:[#allocation4] sm:$0xf]
    %v232 = vld [vmem:[#allocation4 + $0x4] sm:$0xf]
    %v233 = vld [vmem:[#allocation4 + $0x8] sm:$0xf]
    %v234 = vld [vmem:[#allocation4 + $0xc] sm:$0xf]
    %v235 = vld [vmem:[#allocation4 + $0x10] sm:$0xf]
    %v236 = vld [vmem:[#allocation4 + $0x14] sm:$0xf]
    %v237 = vld [vmem:[#allocation4 + $0x18] sm:$0xf]
    %v238 = vld [vmem:[#allocation4 + $0x1c] sm:$0xf]
    %v239 = vld [vmem:[#allocation4 + $0x20] sm:$0xf]
    %v240 = vld [vmem:[#allocation4 + $0x24] sm:$0xf]
    %v241 = vld [vmem:[#allocation4 + $0x28] sm:$0xf]
    %v242 = vld [vmem:[#allocation4 + $0x2c] sm:$0xf]
    %v243 = vld [vmem:[#allocation4 + $0x30] sm:$0xf]
    %v244 = vld [vmem:[#allocation4 + $0x34] sm:$0xf]
    %v245 = vld [vmem:[#allocation4 + $0x38] sm:$0xf]
    %v246 = vld [vmem:[#allocation4 + $0x3c] sm:$0xf]
    %v247 = vld [vmem:[%s6] sm:$0x1]
    %v249 = vlaneseq
    %v250 = vshrl.u32 %v249, 7
    %v251 = vsub.s32 0, %v250
    %v252 = vrot.slane %v247, %v251
    %v270 = vunpack.c.l.b16 %v231
    %v271 = vunpack.c.l.b16 %v232
    %v272 = vunpack.c.l.b16 %v233
    %v273 = vunpack.c.l.b16 %v234
    %v274 = vunpack.c.l.b16 %v235
    %v275 = vunpack.c.l.b16 %v236
    %v276 = vunpack.c.l.b16 %v237
    %v277 = vunpack.c.l.b16 %v238
    %v278 = vunpack.c.l.b16 %v239
    %v279 = vunpack.c.l.b16 %v240
    %v280 = vunpack.c.l.b16 %v241
    %v281 = vunpack.c.l.b16 %v242
    %v282 = vunpack.c.l.b16 %v243
    %v283 = vunpack.c.l.b16 %v244
    %v284 = vunpack.c.l.b16 %v245
    %v285 = vunpack.c.l.b16 %v246
    %v286 = vpack.c.b16 %v271, %v270
    %v287 = vpack.c.b16 %v273, %v272
    %v288 = vpack.c.b16 %v275, %v274
    %v289 = vpack.c.b16 %v277, %v276
    %v290 = vpack.c.b16 %v279, %v278
    %v291 = vpack.c.b16 %v281, %v280
    %v292 = vpack.c.b16 %v283, %v282
    %v293 = vpack.c.b16 %v285, %v284
    %302 = vmatprep.subr.bf16.mxu0 0
    %303 = vmatpush1.bf16.msra.mxu0 %v286
    %304 = vmatprep.subr.bf16.mxu0 0
    %305 = vmatpush1.bf16.msra.mxu0 %v287
    %306 = vmatprep.subr.bf16.mxu0 0
    %307 = vmatpush1.bf16.msra.mxu0 %v288
    %308 = vmatprep.subr.bf16.mxu0 0
    %309 = vmatpush1.bf16.msra.mxu0 %v289
    %310 = vmatprep.subr.bf16.mxu0 0
    %311 = vmatpush1.bf16.msra.mxu0 %v290
    %312 = vmatprep.subr.bf16.mxu0 0
    %313 = vmatpush1.bf16.msra.mxu0 %v291
    %314 = vmatprep.subr.bf16.mxu0 0
    %315 = vmatpush1.bf16.msra.mxu0 %v292
    %316 = vmatprep.subr.bf16.mxu0 0
    %317 = vmatpush1.bf16.msra.mxu0 %v293
    %318 = vmatprep.subr.bf16.mxu0 0
    %319 = vmatpush1.bf16.msra.mxu0 0
    %320 = vmatprep.subr.bf16.mxu0 0
    %321 = vmatpush1.bf16.msra.mxu0 0
    %322 = vmatprep.subr.bf16.mxu0 0
    %323 = vmatpush1.bf16.msra.mxu0 0
    %324 = vmatprep.subr.bf16.mxu0 0
    %325 = vmatpush1.bf16.msra.mxu0 0
    %326 = vmatprep.subr.bf16.mxu0 0
    %327 = vmatpush1.bf16.msra.mxu0 0
    %328 = vmatprep.subr.bf16.mxu0 0
    %329 = vmatpush1.bf16.msra.mxu0 0
    %330 = vmatprep.subr.bf16.mxu0 0
    %331 = vmatpush1.bf16.msra.mxu0 0
    %332 = vmatprep.subr.bf16.mxu0 0
    %333 = vmatpush1.bf16.msra.mxu0 0
    %334 = vmatprep.mubr.bf16.mxu0 0
    %335 = vmatmul.mubr.bf16.gmra.mrb[0].mxu0 %v230
    %v336 = vpop.f32.mrb[0].mxu0
    %v337 = vadd.f32 %v252, %v336
    %v338 = vpop.f32.mrb[0].mxu0
    %v339 = vpop.f32.mrb[0].mxu0
    %v340 = vpop.f32.mrb[0].mxu0
    %341 = vdwg.mxu0
    %v342 = vlaneseq
    %v343 = vand.u32 %v342, 127
    %vm344 = vcmp.lt.s32.totalorder %v343, 8
    %v345 = vsel %vm344, %v337, -inf
    %346 = vmax.xlane.f32.xlu0 %v345
    %v347 = vpop.xlane.xlu0 %346
    %v348 = vsub.f32 %v345, %v347
    %v349 = vmul.f32 %v348, 1.442695
    %v350 = vpow.pop %v349
    %351 = vadd.xlane.f32.xlu0 %v350
    %v352 = vpop.xlane.xlu0 %351
    %v353 = vlog2.pop %v352
    %v354 = vmul.f32 %v353, 0.6931472
    %v355 = vadd.f32 %v347, %v354
    %v356 = vsub.f32 %v337, %v355
    %v357 = vsel %vm344, %v356, %v337
    %vm358 = vcmp.eq.s32.totalorder %v343, 9
    %v359 = vsel %vm358, %v355, %v357
    %360 = vst [vmem:[%s7] sm:$0xff] %v359
    // Predicated region
    $region38: #{agent_policy_forward.1} parent=1 // pred_check
      _
    $region39: #{agent_policy_forward.1} parent=1 // pred_check_branch
      %362 = sbr.rel (0) target = $region41
    $region40: #{agent_policy_forward.1} parent=1 // pred_region
      _
    $region41: #{agent_policy_forward.1} parent=1 // pred_fallthru
      _
    // Predicated region
    $region42: #{agent_policy_forward.1} parent=1 // pred_check
      _
    $region43: #{agent_policy_forward.1} parent=1 // pred_check_branch
      %364 = sbr.rel (0) target = $region45
    $region44: #{agent_policy_forward.1} parent=1 // pred_region
      _
    $region45: #{agent_policy_forward.1} parent=1 // pred_fallthru
      _
    %365 = vsyncpa [#allocation3], 1
    %366 = vsyncpa [#allocation5], 1

</llo_original>
